<compile_context>
chip_gen: v7x
topology: tpu7x:2x2x1
jax: 0.10.0
libtpu: 0.0.40
codegen_flags: <defaults>
</compile_context>

<pallas_src>
import math

import jax
import jax.numpy as jnp
from jax.experimental import pallas as pl
from jax.experimental.pallas import tpu as pltpu

_LANE = 128
_SUBLANE = 8
_VMEM_LIMIT = 32 * 1024 * 1024  # explicit scoped-VMEM budget (safe on v5e/v6e/v7x)


def _round_up(x, m):
    return ((x + m - 1) // m) * m


def _pad2d(x, rows, cols):
    r, c = x.shape
    if r == rows and c == cols:
        return x
    return jnp.pad(x, ((0, rows - r), (0, cols - c)))


# --------------------------- projection kernel: y = x @ W + b ----------------------------
def _linear_kernel(x_ref, w_ref, b_ref, o_ref):
    acc = jnp.dot(x_ref[...], w_ref[...], preferred_element_type=jnp.float32)
    o_ref[...] = (acc + b_ref[...]).astype(o_ref.dtype)


def _linear(x, w, b, *, block_rows):
    """x: (S_pad, D_pad) bf16, w: (D_pad, D_pad) bf16 (already (in, out)), b: (1, D_pad) f32."""
    s_pad, d_pad = x.shape
    return pl.pallas_call(
        _linear_kernel,
        out_shape=jax.ShapeDtypeStruct((s_pad, d_pad), jnp.bfloat16),
        grid_spec=pltpu.PrefetchScalarGridSpec(
            num_scalar_prefetch=0,
            grid=(s_pad // block_rows,),
            in_specs=[
                pl.BlockSpec((block_rows, d_pad), lambda i: (i, 0)),
                pl.BlockSpec((d_pad, d_pad), lambda i: (0, 0)),
                pl.BlockSpec((1, d_pad), lambda i: (0, 0)),
            ],
            out_specs=pl.BlockSpec((block_rows, d_pad), lambda i: (i, 0)),
        ),
        compiler_params=pltpu.CompilerParams(
            dimension_semantics=("parallel",),
            vmem_limit_bytes=_VMEM_LIMIT,
        ),
    )(x, w, b)


# --------------------------- flash-style attention kernel --------------------------------
def _make_attention_kernel(*, sm_scale, causal, has_mask, seq_k, block_q, block_k,
                           mask_kv_pad):
    def kernel(*refs):
        if has_mask:
            mask_ref, q_ref, k_ref, v_ref, o_ref, m_sc, l_sc, acc_sc = refs
        else:
            q_ref, k_ref, v_ref, o_ref, m_sc, l_sc, acc_sc = refs

        qi = pl.program_id(0)
        ki = pl.program_id(1)

        @pl.when(ki == 0)
        def _():
            m_sc[...] = jnp.full_like(m_sc, -jnp.inf)
            l_sc[...] = jnp.zeros_like(l_sc)
            acc_sc[...] = jnp.zeros_like(acc_sc)

        # scores for this (q-tile, kv-tile): bf16 MXU operands, f32 accumulation,
        # K consumed un-transposed via dot_general ('qd,kd->qk').
        s = jax.lax.dot_general(
            q_ref[...], k_ref[...],
            dimension_numbers=(((1,), (1,)), ((), ())),
            preferred_element_type=jnp.float32,
        ) * sm_scale

        if has_mask:
            # PyTorch masked_fill(mask, -1e9) semantics.
            s = jnp.where(mask_ref[...] != 0, jnp.float32(-1.0e9), s)

        if causal or mask_kv_pad:
            col = ki * block_k + jax.lax.broadcasted_iota(
                jnp.int32, (block_q, block_k), 1)
            if causal:
                row = qi * block_q + jax.lax.broadcasted_iota(
                    jnp.int32, (block_q, block_k), 0)
                s = jnp.where(col > row, jnp.float32(-1.0e9), s)
            if mask_kv_pad:
                # Padded key positions: far below the -1e9 user-mask value so they
                # never contribute (softmax stays over the true seq_k keys).
                s = jnp.where(col >= seq_k, jnp.float32(-1.0e30), s)

        # online softmax update
        m_prev = m_sc[...]
        m_new = jnp.maximum(m_prev, jnp.max(s, axis=-1, keepdims=True))
        alpha = jnp.exp(m_prev - m_new)
        p = jnp.exp(s - m_new)
        l_sc[...] = alpha * l_sc[...] + jnp.sum(p, axis=-1, keepdims=True)
        acc_sc[...] = alpha * acc_sc[...] + jnp.dot(
            p.astype(v_ref.dtype), v_ref[...], preferred_element_type=jnp.float32)
        m_sc[...] = m_new

        @pl.when(ki == pl.num_programs(1) - 1)
        def _():
            o_ref[...] = (acc_sc[...] * pl.reciprocal(l_sc[...], approx=True)
                          ).astype(o_ref.dtype)

    return kernel


def attention_forward(enc_q, enc_k, enc_v, params, mask=None, causal=False,
                      block_q=256, block_k=256):
    """Pallas reproduction of Attention.forward.

    enc_q: (Sq, D); enc_k/enc_v: (Sk, D); params hold PyTorch-shaped W_* (out,in), b_* (D,).
    mask: optional (Sq, Sk) bool/int array -- True => fill score with -1e9 (masked_fill).
    causal: fast path -- (j > i) mask generated in-kernel (no mask DMA).
    """
    Sq, D = enc_q.shape
    Sk, Dk = enc_k.shape
    assert enc_v.shape == (Sk, D) and Dk == D

    d_pad = _round_up(D, _LANE)
    bq = min(block_q, _round_up(Sq, _SUBLANE))
    bk = min(block_k, _round_up(Sk, _SUBLANE))
    sq_pad = _round_up(Sq, bq)
    sk_pad = _round_up(Sk, bk)

    # ---- host-side weight prep: transpose to (in, out) once, zero-pad, cast bf16 ----
    def prep_w(w):
        return _pad2d(w.T.astype(jnp.bfloat16), d_pad, d_pad)

    def prep_b(b):
        return _pad2d(b.reshape(1, D).astype(jnp.float32), 1, d_pad)

    xq = _pad2d(enc_q.astype(jnp.bfloat16), sq_pad, d_pad)
    xk = _pad2d(enc_k.astype(jnp.bfloat16), sk_pad, d_pad)
    xv = _pad2d(enc_v.astype(jnp.bfloat16), sk_pad, d_pad)

    # ---- projections: K/V projected once (hoisted out of the q-tile loop) ----
    q = _linear(xq, prep_w(params["W_q"]), prep_b(params["b_q"]), block_rows=bq)
    k = _linear(xk, prep_w(params["W_k"]), prep_b(params["b_k"]), block_rows=bk)
    v = _linear(xv, prep_w(params["W_v"]), prep_b(params["b_v"]), block_rows=bk)

    has_mask = mask is not None
    kernel = _make_attention_kernel(
        sm_scale=1.0 / math.sqrt(float(D)),
        causal=causal,
        has_mask=has_mask,
        seq_k=Sk,
        block_q=bq,
        block_k=bk,
        mask_kv_pad=(sk_pad != Sk),
    )

    in_specs = []
    inputs = []
    if has_mask:
        mask_i8 = _pad2d(mask.astype(jnp.int8), sq_pad, sk_pad)
        in_specs.append(pl.BlockSpec((bq, bk), lambda i, j: (i, j)))
        inputs.append(mask_i8)
    in_specs += [
        pl.BlockSpec((bq, d_pad), lambda i, j: (i, 0)),
        pl.BlockSpec((bk, d_pad), lambda i, j: (j, 0)),
        pl.BlockSpec((bk, d_pad), lambda i, j: (j, 0)),
    ]
    inputs += [q, k, v]

    out = pl.pallas_call(
        kernel,
        out_shape=jax.ShapeDtypeStruct((sq_pad, d_pad), jnp.float32),
        grid_spec=pltpu.PrefetchScalarGridSpec(
            num_scalar_prefetch=0,
            grid=(sq_pad // bq, sk_pad // bk),
            in_specs=in_specs,
            out_specs=pl.BlockSpec((bq, d_pad), lambda i, j: (i, 0)),
            scratch_shapes=[
                pltpu.VMEM((bq, 1), jnp.float32),      # running max m
                pltpu.VMEM((bq, 1), jnp.float32),      # running sum l
                pltpu.VMEM((bq, d_pad), jnp.float32),  # accumulator
            ],
        ),
        compiler_params=pltpu.CompilerParams(
            dimension_semantics=("parallel", "arbitrary"),
            vmem_limit_bytes=_VMEM_LIMIT,
        ),
    )(*inputs)

    return out[:Sq, :D]


# ----------------------------------- helpers / reference -----------------------------------
def init_params(key, d_model):
    """Deterministic nn.Linear-style init: U(-1/sqrt(fan_in), 1/sqrt(fan_in))."""
    bound = 1.0 / math.sqrt(d_model)
    keys = jax.random.split(key, 6)
    mk = lambda k, shape: jax.random.uniform(k, shape, jnp.float32, -bound, bound)
    return {
        "W_q": mk(keys[0], (d_model, d_model)), "b_q": mk(keys[1], (d_model,)),
        "W_k": mk(keys[2], (d_model, d_model)), "b_k": mk(keys[3], (d_model,)),
        "W_v": mk(keys[4], (d_model, d_model)), "b_v": mk(keys[5], (d_model,)),
    }


def _reference(enc_q, enc_k, enc_v, params, mask=None):
    q = enc_q @ params["W_q"].T + params["b_q"]
    k = enc_k @ params["W_k"].T + params["b_k"]
    v = enc_v @ params["W_v"].T + params["b_v"]
    sims = (q @ k.T) / jnp.sqrt(jnp.float32(enc_q.shape[-1]))
    if mask is not None:
        sims = jnp.where(mask, -1.0e9, sims)
    return jax.nn.softmax(sims, axis=-1) @ v


if __name__ == "__main__":
    key = jax.random.PRNGKey(0)
    kp1, kq1, kk1, kv1, km, kp2, kq2, kk2, kv2 = jax.random.split(key, 9)

    TOL = dict(atol=2e-2, rtol=2e-2)  # bf16 MXU operands vs f32 reference

    # --- case 1: small module-like shapes (seq=8, d_model=32), no-mask + causal ---
    d1, s1 = 32, 8
    params1 = init_params(kp1, d1)
    q1 = jax.random.normal(kq1, (s1, d1), jnp.float32)
    k1 = jax.random.normal(kk1, (s1, d1), jnp.float32)
    v1 = jax.random.normal(kv1, (s1, d1), jnp.float32)
    causal1 = jnp.triu(jnp.ones((s1, s1), jnp.bool_), k=1)

    out_nomask = attention_forward(q1, k1, v1, params1)
    jax.block_until_ready(out_nomask)
    assert out_nomask.shape == (s1, d1)
    assert jnp.allclose(out_nomask, _reference(q1, k1, v1, params1), **TOL)

    out_causal = attention_forward(q1, k1, v1, params1, causal=True)
    assert jnp.allclose(out_causal, _reference(q1, k1, v1, params1, mask=causal1), **TOL)

    # --- case 2: tiled path (2x2 grid, 128-tiles), padded seq/feature dims -------
    d2, sq2, sk2 = 96, 200, 176
    params2 = init_params(kp2, d2)
    q2 = jax.random.normal(kq2, (sq2, d2), jnp.float32)
    k2 = jax.random.normal(kk2, (sk2, d2), jnp.float32)
    v2 = jax.random.normal(kv2, (sk2, d2), jnp.float32)

    out2 = attention_forward(q2, k2, v2, params2, causal=True, block_q=128, block_k=128)
    causal2 = jnp.triu(jnp.ones((sq2, sk2), jnp.bool_), k=1)
    assert out2.shape == (sq2, d2)
    assert jnp.allclose(out2, _reference(q2, k2, v2, params2, mask=causal2), **TOL)

    mask2 = jax.random.bernoulli(km, 0.3, (sq2, sk2))
    mask2 = mask2.at[:, 0].set(False)  # keep at least one unmasked key per row
    out3 = attention_forward(q2, k2, v2, params2, mask=mask2, block_q=128, block_k=128)
    assert jnp.allclose(out3, _reference(q2, k2, v2, params2, mask=mask2), **TOL)

    jax.block_until_ready((out_causal, out2, out3))
    print("KERNEL_OK")
</pallas_src>

<mosaic_0001>
module attributes {stable_mosaic.version = 11 : i64} {
  func.func @_linear_kernel(%arg0: i32, %arg1: memref<8x128xbf16, #tpu.memory_space<vmem>>, %arg2: memref<128x128xbf16, #tpu.memory_space<vmem>>, %arg3: memref<1x128xf32, #tpu.memory_space<vmem>>, %arg4: memref<8x128xbf16, #tpu.memory_space<vmem>>) attributes {dimension_semantics = [#tpu.dimension_semantics<parallel>], iteration_bounds = array<i64: 1>, scalar_prefetch = 0 : i64, scratch_operands = 0 : i64, tpu.core_type = #tpu.core_type<tc>, window_params = [{transform_indices = @transform_0, window_bounds = array<i64: 8, 128>}, {pipeline_mode = #tpu.pipeline_mode<synchronous>, transform_indices = @transform_1, window_bounds = array<i64: 128, 128>}, {pipeline_mode = #tpu.pipeline_mode<synchronous>, transform_indices = @transform_2, window_bounds = array<i64: 1, 128>}, {transform_indices = @transform_3, window_bounds = array<i64: 8, 128>}]} {
    %c0 = arith.constant 0 : index
    %c0_0 = arith.constant 0 : index
    %0 = vector.load %arg1[%c0, %c0_0] : memref<8x128xbf16, #tpu.memory_space<vmem>>, vector<8x128xbf16>
    %c0_1 = arith.constant 0 : index
    %c0_2 = arith.constant 0 : index
    %1 = vector.load %arg2[%c0_1, %c0_2] : memref<128x128xbf16, #tpu.memory_space<vmem>>, vector<128x128xbf16>
    %cst = arith.constant dense<0.000000e+00> : vector<8x128xf32>
    %2 = tpu.matmul %0, %1, %cst {dimension_numbers = #tpu.dot_dimension_numbers<[1], [0], [0], [1], [0, 0, 1, 1], [], []>} : vector<8x128xbf16>, vector<128x128xbf16>, vector<8x128xf32> -> vector<8x128xf32>
    %c0_3 = arith.constant 0 : index
    %c0_4 = arith.constant 0 : index
    %3 = vector.load %arg3[%c0_3, %c0_4] : memref<1x128xf32, #tpu.memory_space<vmem>>, vector<1x128xf32>
    %4 = vector.broadcast %3 : vector<1x128xf32> to vector<8x128xf32>
    %5 = arith.addf %2, %4 : vector<8x128xf32>
    %6 = arith.truncf %5 : vector<8x128xf32> to vector<8x128xbf16>
    %c0_5 = arith.constant 0 : index
    %c0_6 = arith.constant 0 : index
    %7 = vector.load %arg4[%c0_5, %c0_6] : memref<8x128xbf16, #tpu.memory_space<vmem>>, vector<8x128xbf16>
    tpu.vector_store %arg4[%c0_5, %c0_6], %6 {strides = array<i32>} : memref<8x128xbf16, #tpu.memory_space<vmem>>, vector<8x128xbf16>,
    return
  }
  func.func @transform_0(%arg0: i32) -> (i32, i32) {
    %c0_i32 = arith.constant 0 : i32
    %c0_i32_0 = arith.constant 0 : i32
    return %arg0, %c0_i32 : i32, i32
  }
  func.func @transform_1(%arg0: i32) -> (i32, i32) {
    %c0_i32 = arith.constant 0 : i32
    %c0_i32_0 = arith.constant 0 : i32
    %c0_i32_1 = arith.constant 0 : i32
    return %c0_i32, %c0_i32_0 : i32, i32
  }
  func.func @transform_2(%arg0: i32) -> (i32, i32) {
    %c0_i32 = arith.constant 0 : i32
    %c0_i32_0 = arith.constant 0 : i32
    %c0_i32_1 = arith.constant 0 : i32
    return %c0_i32, %c0_i32_0 : i32, i32
  }
  func.func @transform_3(%arg0: i32) -> (i32, i32) {
    %c0_i32 = arith.constant 0 : i32
    %c0_i32_0 = arith.constant 0 : i32
    return %arg0, %c0_i32 : i32, i32
  }
}

</mosaic_0001>

<llo_original>
// kernel: tpu_custom_call.1
$region0: #{tpu_custom_call.1}
  #allocation0 [shape = 'u32[]', space=smem, size = 0x4, offset = 0x4, fixed_abs, tag = 'smem constant byte address 0x4 - core index']
  #allocation1 [shape = 'u32[144,128]{1,0:T(1,128)}', space=vmem, size = 0x12000, scoped, tag = 'internal scratch']
  %s0 = inlined_call_operand.hbm [shape: bf16[8,128], index: 0, kind: input, shape index: {}]
  %s1 = inlined_call_operand.hbm [shape: bf16[128,128], index: 1, kind: input, shape index: {}]
  %s2 = inlined_call_operand.vmem [shape: f32[1,128], index: 2, kind: input, shape index: {}]
  %s3 = inlined_call_operand.hbm [shape: bf16[8,128], index: 3, kind: output, shape index: {}]
  %s4 = sld [smem:[#allocation0]]
  $region30: #{tpu_custom_call.1} parent=0
    _
  %s6 = ssub.s32 1, %s4
  %s7 = scalar_select 0, %s6, %s4
  $region1: #{tpu_custom_call.1} parent=0
    #allocation2 [shape = 'u8[2048]{0}', space=vmem, size = 0x800, scoped, tag = 'input window, operand 0, single buffered']
    #allocation3 [shape = 's32[1]{0}', space=sflag, size = 0x4, scoped, tag = 'scoped memory for tpu_custom_call.1']
    #allocation4 [shape = 's32[1]{0}', space=sflag, size = 0x4, scoped, tag = 'scoped memory for tpu_custom_call.1']
    #allocation5 [shape = 'u8[32768]{0}', space=vmem, size = 0x8000, scoped, tag = 'input window, operand 1, single buffered']
    #allocation6 [shape = 's32[1]{0}', space=sflag, size = 0x4, scoped, tag = 'scoped memory for tpu_custom_call.1']
    #allocation7 [shape = 'u8[2048]{0}', space=vmem, size = 0x800, scoped, tag = 'output window, operand 0, single buffered']
    %8 = vsyncpa [#allocation3], 0
    %9 = vsyncpa [#allocation6], 0
    %10 = vsyncpa [#allocation4], 0
    // Predicated region
    $region2: #{tpu_custom_call.1} parent=1 // pred_check
      _
    $region3: #{tpu_custom_call.1} parent=1 // pred_check_branch
      %12 = sbr.rel (0) target = $region5
    $region4: #{tpu_custom_call.1} parent=1 // pred_region
      %s14 = ssub.s32 64, 64
      %15 = vsyncadd [#allocation3], %s14
      %s17 = sshll.u32 [#allocation2], 4
      %s18 = int_to_ptr.vmem [resolvable:$true] %s17
      %20 = dma.hbm_to_vmem [thread:$0]  %s0, 64, %s18, [#allocation3]
    $region5: #{tpu_custom_call.1} parent=1 // pred_fallthru
      _
    // Predicated region
    $region6: #{tpu_custom_call.1} parent=1 // pred_check
      _
    $region7: #{tpu_custom_call.1} parent=1 // pred_check_branch
      %22 = sbr.rel (0) target = $region9
    $region8: #{tpu_custom_call.1} parent=1 // pred_region
      %s24 = ssub.s32 1024, 1024
      %25 = vsyncadd [#allocation6], %s24
      %s26 = sshll.u32 [#allocation5], 4
      %s27 = int_to_ptr.vmem [resolvable:$true] %s26
      %32 = dma.hbm_to_vmem [thread:$0]  %s1, 1024, %s27, [#allocation6], 64, 64, 4
    $region9: #{tpu_custom_call.1} parent=1 // pred_fallthru
      _
    // Predicated region
    $region10: #{tpu_custom_call.1} parent=1 // pred_check
      _
    $region11: #{tpu_custom_call.1} parent=1 // pred_check_branch
      %34 = sbr.rel (0) target = $region13
    $region12: #{tpu_custom_call.1} parent=1 // pred_region
      _
    $region13: #{tpu_custom_call.1} parent=1 // pred_fallthru
      _
    // Predicated region
    $region14: #{tpu_custom_call.1} parent=1 // pred_check
      _
    $region15: #{tpu_custom_call.1} parent=1 // pred_check_branch
      %36 = sbr.rel (0) target = $region17
    $region16: #{tpu_custom_call.1} parent=1 // pred_region
      %37 = dma.done [#allocation3], 64
    $region17: #{tpu_custom_call.1} parent=1 // pred_fallthru
      _
    // Predicated region
    $region18: #{tpu_custom_call.1} parent=1 // pred_check
      _
    $region19: #{tpu_custom_call.1} parent=1 // pred_check_branch
      %39 = sbr.rel (0) target = $region21
    $region20: #{tpu_custom_call.1} parent=1 // pred_region
      %40 = dma.done [#allocation6], 1024
    $region21: #{tpu_custom_call.1} parent=1 // pred_fallthru
      _
    %v42 = vld [vmem:[#allocation2] sm:$0xf]
    %v43 = vld [vmem:[#allocation5] sm:$0xf]
    %v44 = vld [vmem:[#allocation5 + $0x4] sm:$0xf]
    %v45 = vld [vmem:[#allocation5 + $0x8] sm:$0xf]
    %v46 = vld [vmem:[#allocation5 + $0xc] sm:$0xf]
    %v47 = vld [vmem:[#allocation5 + $0x10] sm:$0xf]
    %v48 = vld [vmem:[#allocation5 + $0x14] sm:$0xf]
    %v49 = vld [vmem:[#allocation5 + $0x18] sm:$0xf]
    %v50 = vld [vmem:[#allocation5 + $0x1c] sm:$0xf]
    %v51 = vld [vmem:[#allocation5 + $0x20] sm:$0xf]
    %v52 = vld [vmem:[#allocation5 + $0x24] sm:$0xf]
    %v53 = vld [vmem:[#allocation5 + $0x28] sm:$0xf]
    %v54 = vld [vmem:[#allocation5 + $0x2c] sm:$0xf]
    %v55 = vld [vmem:[#allocation5 + $0x30] sm:$0xf]
    %v56 = vld [vmem:[#allocation5 + $0x34] sm:$0xf]
    %v57 = vld [vmem:[#allocation5 + $0x38] sm:$0xf]
    %v58 = vld [vmem:[#allocation5 + $0x3c] sm:$0xf]
    %v59 = vld [vmem:[%s2] sm:$0x1]
    %v61 = vlaneseq
    %v62 = vshrl.u32 %v61, 7
    %v63 = vsub.s32 0, %v62
    %v64 = vrot.slane %v59, %v63
    %v82 = vunpack.c.l.b16 %v43
    %v83 = vunpack.c.l.b16 %v44
    %v84 = vunpack.c.l.b16 %v45
    %v85 = vunpack.c.l.b16 %v46
    %v86 = vunpack.c.l.b16 %v47
    %v87 = vunpack.c.l.b16 %v48
    %v88 = vunpack.c.l.b16 %v49
    %v89 = vunpack.c.l.b16 %v50
    %v90 = vunpack.c.l.b16 %v51
    %v91 = vunpack.c.l.b16 %v52
    %v92 = vunpack.c.l.b16 %v53
    %v93 = vunpack.c.l.b16 %v54
    %v94 = vunpack.c.l.b16 %v55
    %v95 = vunpack.c.l.b16 %v56
    %v96 = vunpack.c.l.b16 %v57
    %v97 = vunpack.c.l.b16 %v58
    %v98 = vpack.c.b16 %v83, %v82
    %v99 = vpack.c.b16 %v85, %v84
    %v100 = vpack.c.b16 %v87, %v86
    %v101 = vpack.c.b16 %v89, %v88
    %v102 = vpack.c.b16 %v91, %v90
    %v103 = vpack.c.b16 %v93, %v92
    %v104 = vpack.c.b16 %v95, %v94
    %v105 = vpack.c.b16 %v97, %v96
    %114 = vmatprep.subr.bf16.mxu0 0
    %115 = vmatpush1.bf16.msra.mxu0 %v98
    %116 = vmatprep.subr.bf16.mxu0 0
    %117 = vmatpush1.bf16.msra.mxu0 %v99
    %118 = vmatprep.subr.bf16.mxu0 0
    %119 = vmatpush1.bf16.msra.mxu0 %v100
    %120 = vmatprep.subr.bf16.mxu0 0
    %121 = vmatpush1.bf16.msra.mxu0 %v101
    %122 = vmatprep.subr.bf16.mxu0 0
    %123 = vmatpush1.bf16.msra.mxu0 %v102
    %124 = vmatprep.subr.bf16.mxu0 0
    %125 = vmatpush1.bf16.msra.mxu0 %v103
    %126 = vmatprep.subr.bf16.mxu0 0
    %127 = vmatpush1.bf16.msra.mxu0 %v104
    %128 = vmatprep.subr.bf16.mxu0 0
    %129 = vmatpush1.bf16.msra.mxu0 %v105
    %130 = vmatprep.subr.bf16.mxu0 0
    %131 = vmatpush1.bf16.msra.mxu0 0
    %132 = vmatprep.subr.bf16.mxu0 0
    %133 = vmatpush1.bf16.msra.mxu0 0
    %134 = vmatprep.subr.bf16.mxu0 0
    %135 = vmatpush1.bf16.msra.mxu0 0
    %136 = vmatprep.subr.bf16.mxu0 0
    %137 = vmatpush1.bf16.msra.mxu0 0
    %138 = vmatprep.subr.bf16.mxu0 0
    %139 = vmatpush1.bf16.msra.mxu0 0
    %140 = vmatprep.subr.bf16.mxu0 0
    %141 = vmatpush1.bf16.msra.mxu0 0
    %142 = vmatprep.subr.bf16.mxu0 0
    %143 = vmatpush1.bf16.msra.mxu0 0
    %144 = vmatprep.subr.bf16.mxu0 0
    %145 = vmatpush1.bf16.msra.mxu0 0
    %146 = vmatprep.mubr.bf16.mxu0 0
    %147 = vmatmul.mubr.bf16.gmra.mrb[0].mxu0 %v42
    %v148 = vpop.f32.mrb[0].mxu0
    %v149 = vadd.f32 %v64, %v148
    %v150 = vpop.f32.mrb[0].mxu0
    %v151 = vpop.f32.mrb[0].mxu0
    %v152 = vpop.f32.mrb[0].mxu0
    %153 = vdwg.mxu0
    %v154 = vpack.c.bf16 %v149, %v149
    %155 = vst [vmem:[#allocation7] sm:$0xf] %v154
    // Predicated region
    $region22: #{tpu_custom_call.1} parent=1 // pred_check
      _
    $region23: #{tpu_custom_call.1} parent=1 // pred_check_branch
      %157 = sbr.rel (0) target = $region25
    $region24: #{tpu_custom_call.1} parent=1 // pred_region
      %s159 = ssub.s32 64, 64
      %160 = vsyncadd [#allocation4], %s159
      %s162 = sshll.u32 [#allocation7], 4
      %s163 = int_to_ptr.vmem [resolvable:$true] %s162
      %165 = dma.vmem_to_hbm [thread:$0]  %s163, 64, %s3, [#allocation4]
    $region25: #{tpu_custom_call.1} parent=1 // pred_fallthru
      _
    // Predicated region
    $region26: #{tpu_custom_call.1} parent=1 // pred_check
      _
    $region27: #{tpu_custom_call.1} parent=1 // pred_check_branch
      %167 = sbr.rel (0) target = $region29
    $region28: #{tpu_custom_call.1} parent=1 // pred_region
      %168 = dma.done [#allocation4], 64
    $region29: #{tpu_custom_call.1} parent=1 // pred_fallthru
      _
    %169 = vsyncpa [#allocation3], 1
    %170 = vsyncpa [#allocation6], 1
    %171 = vsyncpa [#allocation4], 1

</llo_original>
